<compile_context>
chip_gen: v7x
topology: tpu7x:2x2x1
jax: 0.10.0
libtpu: 0.0.40
codegen_flags: <defaults>
</compile_context>

<pallas_src>
import math
import numpy as np
import jax
import jax.numpy as jnp
from jax.experimental import pallas as pl
from jax.experimental.pallas import tpu as pltpu

V = 25  # number of skeleton joints, hard-coded inside Shift_gcn


def _make_shift_indices(in_channels, out_channels):
    shift_in = np.empty(V * in_channels, dtype=np.int32)
    for i in range(V):
        for j in range(in_channels):
            shift_in[i * in_channels + j] = (
                i * in_channels + j + j * in_channels
            ) % (in_channels * V)
    shift_out = np.empty(V * out_channels, dtype=np.int32)
    for i in range(V):
        for j in range(out_channels):
            shift_out[i * out_channels + j] = (
                i * out_channels + j - j * out_channels
            ) % (out_channels * V)
    return shift_in, shift_out


def _round_up(x, m):
    return ((x + m - 1) // m) * m


# ---------------------------------------------------------------------------
# Kernel: one fused GEMM + bias + ReLU.  Residuals/BN/permutations are all
# pre-folded into w_ref / shift_ref.
# ---------------------------------------------------------------------------
def _shift_gcn_kernel(x_ref, w_ref, shift_ref, o_ref):
    y = jnp.dot(x_ref[...], w_ref[...], preferred_element_type=jnp.float32)
    o_ref[...] = jnp.maximum(y + shift_ref[...], 0.0).astype(o_ref.dtype)


# ---------------------------------------------------------------------------
# Wrapper: parameter folding + row tiling + pallas_call.
# ---------------------------------------------------------------------------
def shift_gcn_forward(x0, params, *, block_nt=1024, mxu_dtype=jnp.float32):
    n, c, t, v = x0.shape
    assert v == V
    W = params["Linear_weight"]                      # (C, D)
    D = W.shape[1]
    eps = 1e-5
    NT, VC, VD = n * t, v * c, v * D

    # ---- fold shift_in / mask / linear / shift_out / BN into one weight ----
    shift_in = np.asarray(params["shift_in"], dtype=np.int64)
    shift_out = np.asarray(params["shift_out"], dtype=np.int64)
    inv_in = np.argsort(shift_in)                    # inverse permutation

    mask_flat = (jnp.tanh(params["Feature_Mask"]) + 1.0).reshape(VC)
    W_block = jnp.kron(jnp.eye(V, dtype=jnp.float32),
                       W.astype(jnp.float32))        # (VC, VD), block-diagonal
    W_eff = mask_flat[:, None] * W_block             # diag(mask) @ W_block
    W_eff = W_eff[inv_in, :]                         # P_in @ .
    W_eff = W_eff[:, shift_out]                      # . @ P_out

    inv_std = 1.0 / jnp.sqrt(params["bn_rv"] + eps)
    bn_scale = params["bn_gamma"] * inv_std
    bn_shift = params["bn_beta"] - params["bn_rm"] * bn_scale
    W_eff = W_eff * bn_scale[None, :]                # fold BN scale

    bias_flat = jnp.tile(params["Linear_bias"].reshape(D), V)       # (VD,)
    shift_eff = bias_flat[shift_out] * bn_scale + bn_shift          # (VD,)

    # ---- fold the residual branch into W_eff / shift_eff ------------------
    if c == D:
        # identity downsample: residual is x itself.
        W_eff = W_eff + jnp.eye(VC, dtype=jnp.float32)
    else:
        # 1x1 Conv2d + BatchNorm2d (eval mode): linear + affine in x_flat.
        down_scale = params["down_g"] / jnp.sqrt(params["down_rv"] + eps)
        W_down = jnp.kron(jnp.eye(V, dtype=jnp.float32),
                          params["down_w"].astype(jnp.float32)
                          * down_scale[None, :])                     # (VC, VD)
        W_eff = W_eff + W_down
        down_shift = (params["down_b"] - params["down_rm"]) * down_scale \
            + params["down_beta"]
        shift_eff = shift_eff + jnp.tile(down_shift, V)

    # ---- layout: (N*T, V*C), joint-major / channel-minor (view(n*t, v*c)) --
    # pre-cast to the MXU dtype here (fuses into the transpose); bf16 halves
    # the x HBM stream on v6e/v7x.
    x_flat = jnp.transpose(x0, (0, 2, 3, 1)).reshape(NT, VC).astype(mxu_dtype)

    # ---- row tiling (no feature-axis padding: full-extent last dims) ------
    block_nt = max(8, min(int(block_nt), _round_up(NT, 8)))
    block_nt = _round_up(block_nt, 8)
    if NT > 8 and _round_up(NT, block_nt) == block_nt:
        # keep >= 2 grid blocks so v7x megacore can shard rows across both TCs
        block_nt = max(8, _round_up((NT + 1) // 2, 8))
    NT_pad = _round_up(NT, block_nt)
    if NT_pad != NT:
        x_flat = jnp.pad(x_flat, ((0, NT_pad - NT), (0, 0)))

    W_p = W_eff.astype(mxu_dtype)                    # (VC, VD)
    s_p = shift_eff.reshape(1, VD).astype(jnp.float32)

    grid = (NT_pad // block_nt,)
    in_isz = int(jnp.dtype(mxu_dtype).itemsize)
    out_isz = int(jnp.dtype(x0.dtype).itemsize)
    cost = pl.CostEstimate(
        flops=2 * NT_pad * VC * VD,
        transcendentals=0,
        bytes_accessed=(NT_pad * VC * in_isz          # x stream
                        + VC * VD * in_isz            # resident weight
                        + VD * 4                      # shift
                        + NT_pad * VD * out_isz))     # output stream

    out_p = pl.pallas_call(
        _shift_gcn_kernel,
        out_shape=jax.ShapeDtypeStruct((NT_pad, VD), x0.dtype),
        grid_spec=pltpu.PrefetchScalarGridSpec(
            num_scalar_prefetch=0,
            grid=grid,
            in_specs=[
                pl.BlockSpec((block_nt, VC), lambda i: (i, 0)),   # x rows
                pl.BlockSpec((VC, VD), lambda i: (0, 0)),         # W_eff (resident)
                pl.BlockSpec((1, VD), lambda i: (0, 0)),          # shift_eff
            ],
            out_specs=pl.BlockSpec((block_nt, VD), lambda i: (i, 0)),
        ),
        compiler_params=pltpu.CompilerParams(
            dimension_semantics=("parallel",),
            vmem_limit_bytes=32 * 1024 * 1024),
        cost_estimate=cost,
    )(x_flat, W_p, s_p)

    out_flat = out_p if NT_pad == NT else out_p[:NT]
    # back to NCHW-like (n, D, t, v)
    return out_flat.reshape(n, t, v, D).transpose(0, 3, 1, 2)


# ---------------------------------------------------------------------------
# Pure-JAX reference (replica of the PyTorch forward, eval-mode BN).
# ---------------------------------------------------------------------------
def shift_gcn_reference(x0, params):
    n, c, t, v = x0.shape
    W = params["Linear_weight"]
    D = W.shape[1]
    eps = 1e-5
    x = jnp.transpose(x0, (0, 2, 3, 1)).reshape(n * t, v * c)
    x = jnp.take(x, jnp.asarray(params["shift_in"]), axis=1)
    x = x.reshape(n * t, v, c)
    x = x * (jnp.tanh(params["Feature_Mask"])[None] + 1.0)
    x = jnp.einsum("nwc,cd->nwd", x, W) + params["Linear_bias"].reshape(1, 1, D)
    x = x.reshape(n * t, -1)
    x = jnp.take(x, jnp.asarray(params["shift_out"]), axis=1)
    x = (x - params["bn_rm"]) / jnp.sqrt(params["bn_rv"] + eps)
    x = x * params["bn_gamma"] + params["bn_beta"]
    x = x.reshape(n, t, v, D).transpose(0, 3, 1, 2)
    if c == D:
        res = x0
    else:
        xc = jnp.transpose(x0, (0, 2, 3, 1))
        d = jnp.einsum("ntvc,cd->ntvd", xc, params["down_w"]) + params["down_b"]
        d = (d - params["down_rm"]) / jnp.sqrt(params["down_rv"] + eps)
        d = d * params["down_g"] + params["down_beta"]
        res = d.transpose(0, 3, 1, 2)
    return jnp.maximum(x + res, 0.0)


if __name__ == "__main__":
    key = jax.random.PRNGKey(0)
    ks = jax.random.split(key, 16)

    # ---- case 1: identity downsample (c == D), f32 MXU path, tight check ----
    n, t = 2, 8
    c = D = 16
    x0 = jax.random.normal(ks[0], (n, c, t, V), dtype=jnp.float32)

    shift_in, shift_out = _make_shift_indices(c, D)
    params = {
        "Linear_weight": jax.random.normal(ks[1], (c, D), jnp.float32)
                         * math.sqrt(1.0 / D),
        "Linear_bias": 0.1 * jax.random.normal(ks[2], (D,), jnp.float32),
        "Feature_Mask": 0.5 * jax.random.normal(ks[3], (V, c), jnp.float32),
        "bn_gamma": 1.0 + 0.1 * jax.random.normal(ks[4], (V * D,), jnp.float32),
        "bn_beta": 0.1 * jax.random.normal(ks[5], (V * D,), jnp.float32),
        "bn_rm": 0.1 * jax.random.normal(ks[6], (V * D,), jnp.float32),
        "bn_rv": jnp.abs(jax.random.normal(ks[7], (V * D,), jnp.float32)) + 0.5,
        "shift_in": shift_in,
        "shift_out": shift_out,
    }

    out = jax.block_until_ready(shift_gcn_forward(x0, params))
    assert out.shape == (n, D, t, V)
    ref = shift_gcn_reference(x0, params)
    np.testing.assert_allclose(np.asarray(out), np.asarray(ref),
                               rtol=1e-4, atol=1e-4)

    # ---- case 2: same inputs, bf16 MXU path (v5e/v6e/v7x), loose check ------
    out_bf16 = jax.block_until_ready(
        shift_gcn_forward(x0, params, mxu_dtype=jnp.bfloat16))
    max_err = float(jnp.max(jnp.abs(out_bf16 - ref)))
    assert max_err < 0.25, f"bf16 MXU path max abs err too large: {max_err}"

    # ---- case 3: non-identity downsample branch (c != D), folded, f32 -------
    c2, D2 = 8, 16
    x1 = jax.random.normal(ks[8], (n, c2, t, V), dtype=jnp.float32)
    si2, so2 = _make_shift_indices(c2, D2)
    params2 = {
        "Linear_weight": jax.random.normal(ks[9], (c2, D2), jnp.float32)
                         * math.sqrt(1.0 / D2),
        "Linear_bias": 0.1 * jax.random.normal(ks[10], (D2,), jnp.float32),
        "Feature_Mask": 0.5 * jax.random.normal(ks[11], (V, c2), jnp.float32),
        "bn_gamma": jnp.ones((V * D2,), jnp.float32),
        "bn_beta": jnp.zeros((V * D2,), jnp.float32),
        "bn_rm": jnp.zeros((V * D2,), jnp.float32),
        "bn_rv": jnp.ones((V * D2,), jnp.float32),
        "down_w": 0.3 * jax.random.normal(ks[12], (c2, D2), jnp.float32),
        "down_b": 0.1 * jax.random.normal(ks[13], (D2,), jnp.float32),
        "down_rm": jnp.zeros((D2,), jnp.float32),
        "down_rv": jnp.ones((D2,), jnp.float32),
        "down_g": jnp.ones((D2,), jnp.float32),
        "down_beta": jnp.zeros((D2,), jnp.float32),
        "shift_in": si2,
        "shift_out": so2,
    }
    out2 = jax.block_until_ready(shift_gcn_forward(x1, params2, block_nt=128))
    ref2 = shift_gcn_reference(x1, params2)
    np.testing.assert_allclose(np.asarray(out2), np.asarray(ref2),
                               rtol=1e-4, atol=1e-4)

    print("KERNEL_OK")
</pallas_src>

<mosaic_0001>
module attributes {stable_mosaic.version = 11 : i64} {
  func.func @_shift_gcn_kernel(%arg0: i32, %arg1: memref<8x400xf32, #tpu.memory_space<vmem>>, %arg2: memref<400x400xf32, #tpu.memory_space<vmem>>, %arg3: memref<1x400xf32, #tpu.memory_space<vmem>>, %arg4: memref<8x400xf32, #tpu.memory_space<vmem>>) attributes {dimension_semantics = [#tpu.dimension_semantics<parallel>], iteration_bounds = array<i64: 2>, scalar_prefetch = 0 : i64, scratch_operands = 0 : i64, tpu.core_type = #tpu.core_type<tc>, window_params = [{transform_indices = @transform_0, window_bounds = array<i64: 8, 400>}, {pipeline_mode = #tpu.pipeline_mode<synchronous>, transform_indices = @transform_1, window_bounds = array<i64: 400, 400>}, {pipeline_mode = #tpu.pipeline_mode<synchronous>, transform_indices = @transform_2, window_bounds = array<i64: 1, 400>}, {transform_indices = @transform_3, window_bounds = array<i64: 8, 400>}]} {
    %c0 = arith.constant 0 : index
    %c0_0 = arith.constant 0 : index
    %0 = vector.load %arg1[%c0, %c0_0] : memref<8x400xf32, #tpu.memory_space<vmem>>, vector<8x400xf32>
    %c0_1 = arith.constant 0 : index
    %c0_2 = arith.constant 0 : index
    %1 = vector.load %arg2[%c0_1, %c0_2] : memref<400x400xf32, #tpu.memory_space<vmem>>, vector<400x400xf32>
    %cst = arith.constant dense<0.000000e+00> : vector<8x400xf32>
    %2 = tpu.matmul %0, %1, %cst {dimension_numbers = #tpu.dot_dimension_numbers<[1], [0], [0], [1], [0, 0, 1, 1], [], []>} : vector<8x400xf32>, vector<400x400xf32>, vector<8x400xf32> -> vector<8x400xf32>
    %c0_3 = arith.constant 0 : index
    %c0_4 = arith.constant 0 : index
    %3 = vector.load %arg3[%c0_3, %c0_4] : memref<1x400xf32, #tpu.memory_space<vmem>>, vector<1x400xf32>
    %4 = vector.broadcast %3 : vector<1x400xf32> to vector<8x400xf32>
    %5 = arith.addf %2, %4 : vector<8x400xf32>
    %cst_5 = arith.constant 0.000000e+00 : f32
    %6 = vector.broadcast %cst_5 : f32 to vector<8x400xf32>
    %7 = arith.maximumf %5, %6 : vector<8x400xf32>
    %c0_6 = arith.constant 0 : index
    %c0_7 = arith.constant 0 : index
    %8 = vector.load %arg4[%c0_6, %c0_7] : memref<8x400xf32, #tpu.memory_space<vmem>>, vector<8x400xf32>
    tpu.vector_store %arg4[%c0_6, %c0_7], %7 {strides = array<i32>} : memref<8x400xf32, #tpu.memory_space<vmem>>, vector<8x400xf32>,
    return
  }
  func.func @transform_0(%arg0: i32) -> (i32, i32) {
    %c0_i32 = arith.constant 0 : i32
    %c0_i32_0 = arith.constant 0 : i32
    return %arg0, %c0_i32 : i32, i32
  }
  func.func @transform_1(%arg0: i32) -> (i32, i32) {
    %c0_i32 = arith.constant 0 : i32
    %c0_i32_0 = arith.constant 0 : i32
    %c0_i32_1 = arith.constant 0 : i32
    return %c0_i32, %c0_i32_0 : i32, i32
  }
  func.func @transform_2(%arg0: i32) -> (i32, i32) {
    %c0_i32 = arith.constant 0 : i32
    %c0_i32_0 = arith.constant 0 : i32
    %c0_i32_1 = arith.constant 0 : i32
    return %c0_i32, %c0_i32_0 : i32, i32
  }
  func.func @transform_3(%arg0: i32) -> (i32, i32) {
    %c0_i32 = arith.constant 0 : i32
    %c0_i32_0 = arith.constant 0 : i32
    return %arg0, %c0_i32 : i32, i32
  }
}

</mosaic_0001>

<llo_original>
// kernel: tpu_custom_call.1
$region0: #{tpu_custom_call.1}
  #allocation0 [shape = 'u32[]', space=smem, size = 0x4, offset = 0x4, fixed_abs, tag = 'smem constant byte address 0x4 - core index']
  #allocation1 [shape = 'u32[144,128]{1,0:T(1,128)}', space=vmem, size = 0x12000, scoped, tag = 'internal scratch']
  %s0 = inlined_call_operand.hbm [shape: f32[16,400], index: 0, kind: input, shape index: {}]
  %s1 = inlined_call_operand.hbm [shape: f32[400,400], index: 1, kind: input, shape index: {}]
  %s2 = inlined_call_operand.vmem [shape: f32[1,400], index: 2, kind: input, shape index: {}]
  %s3 = inlined_call_operand.hbm [shape: f32[16,400], index: 3, kind: output, shape index: {}]
  %s4 = sld [smem:[#allocation0]]
  $region53: #{tpu_custom_call.1} parent=0
    _
  %s6 = ssub.s32 1, %s4
  %s7 = scalar_select 0, %s6, %s4
  $region1: #{tpu_custom_call.1} parent=0
    #allocation2 [shape = 'u8[32768]{0}', space=vmem, size = 0x8000, scoped, tag = 'input window, operand 0']
    #allocation3 [shape = 's32[2]{0}', space=sflag, size = 0x8, scoped, tag = 'scoped memory for tpu_custom_call.1']
    #allocation4 [shape = 's32[2]{0}', space=sflag, size = 0x8, scoped, tag = 'scoped memory for tpu_custom_call.1']
    #allocation5 [shape = 'u8[819200]{0}', space=vmem, size = 0xc8000, scoped, tag = 'input window, operand 1, single buffered']
    #allocation6 [shape = 's32[1]{0}', space=sflag, size = 0x4, scoped, tag = 'scoped memory for tpu_custom_call.1']
    #allocation7 [shape = 'u8[32768]{0}', space=vmem, size = 0x8000, scoped, tag = 'output window, operand 0']
    %8 = vsyncpa [#allocation3], 0
    %s9 = scalar_lea.sflag [#allocation3], 1
    %10 = vsyncpa %s9, 0
    %11 = vsyncpa [#allocation6], 0
    %12 = vsyncpa [#allocation4], 0
    %s13 = scalar_lea.sflag [#allocation4], 1
    %14 = vsyncpa %s13, 0
    loop: start=0, step=1, limit=4
    $region2: #{tpu_custom_call.1} parent=1 // loop_pre_header
      _
    $region3: #{tpu_custom_call.1} parent=1 // loop_header
      %s16 = sphi 0, %s20
      %p17 = scmp.ge.s32.totalorder %s16, 4
      %s26 = sphi 0, %s28
      %s29 = sphi 0, %s26
      %s30 = sphi 0, %s29
      %s46 = sphi 0, %s30
      %s50 = sphi 0, %s50
      %s52 = sphi 0, %s50
      %s53 = sphi 0, %s52
      %s67 = sphi 0, %s53
      %s71 = sphi 0, %s71
      %s73 = sphi 0, %s71
      %s74 = sphi 0, %s73
      %s88 = sphi 0, %s74
      %s94 = sphi 0, %s96
      %s97 = sphi 0, %s94
      %s98 = sphi 0, %s97
      %s114 = sphi 0, %s98
    $region4: #{tpu_custom_call.1} parent=1 // loop_header_branch
      %19 = sbr.rel (%p17) target = $region8
    $region5: #{tpu_custom_call.1} parent=1 // loop_body
      %s21 = ssub.s32 %s16, 1
      %s22 = ssub.s32 %s16, 2
      %s23 = sadd.s32 %s16, 1
      %s24 = ssub.s32 %s16, %s23
      %p25 = scmp.eq.s32.totalorder %s24, 0
      %s27 = sadd.s32 %s26, 1
      %s28 = scalar_select %p25, %s26, %s27
      %p31 = pneg %p25
      %p32 = scmp.eq.s32.totalorder %s16, 1
      %p33 = por %p31, %p32
      %p34 = scmp.ne.s32.totalorder %s26, %s29
      %p35 = scmp.eq.s32.totalorder %s16, 0
      %p36 = por %p34, %p35
      %p37 = scmp.ne.s32.totalorder %s26, %s29
      %p38 = scmp.eq.s32.totalorder %s21, 1
      %p39 = por %p37, %p38
      %p40 = scmp.ne.s32.totalorder %s29, %s30
      %p41 = scmp.eq.s32.totalorder %s21, 0
      %p42 = por %p40, %p41
      %p43 = scmp.ne.s32.totalorder %s29, %s30
      %p44 = scmp.eq.s32.totalorder %s22, 1
      %p45 = por %p43, %p44
      %p47 = scmp.ne.s32.totalorder %s30, %s46
      %p48 = scmp.eq.s32.totalorder %s22, 0
      %p49 = por %p47, %p48
      %s51 = sadd.s32 %s50, 1
      %p54 = scmp.eq.s32.totalorder %s16, 1
      %p55 = scmp.ne.s32.totalorder %s50, %s52
      %p56 = scmp.eq.s32.totalorder %s16, 0
      %p57 = por %p55, %p56
      %p58 = scmp.ne.s32.totalorder %s50, %s52
      %p59 = scmp.eq.s32.totalorder %s21, 1
      %p60 = por %p58, %p59
      %p61 = scmp.ne.s32.totalorder %s52, %s53
      %p62 = scmp.eq.s32.totalorder %s21, 0
      %p63 = por %p61, %p62
      %p64 = scmp.ne.s32.totalorder %s52, %s53
      %p65 = scmp.eq.s32.totalorder %s22, 1
      %p66 = por %p64, %p65
      %p68 = scmp.ne.s32.totalorder %s53, %s67
      %p69 = scmp.eq.s32.totalorder %s22, 0
      %p70 = por %p68, %p69
      %s72 = sadd.s32 %s71, 1
      %p75 = scmp.eq.s32.totalorder %s16, 1
      %p76 = scmp.ne.s32.totalorder %s71, %s73
      %p77 = scmp.eq.s32.totalorder %s16, 0
      %p78 = por %p76, %p77
      %p79 = scmp.ne.s32.totalorder %s71, %s73
      %p80 = scmp.eq.s32.totalorder %s21, 1
      %p81 = por %p79, %p80
      %p82 = scmp.ne.s32.totalorder %s73, %s74
      %p83 = scmp.eq.s32.totalorder %s21, 0
      %p84 = por %p82, %p83
      %p85 = scmp.ne.s32.totalorder %s73, %s74
      %p86 = scmp.eq.s32.totalorder %s22, 1
      %p87 = por %p85, %p86
      %p89 = scmp.ne.s32.totalorder %s74, %s88
      %p90 = scmp.eq.s32.totalorder %s22, 0
      %p91 = por %p89, %p90
      %s92 = ssub.s32 %s16, %s23
      %p93 = scmp.eq.s32.totalorder %s92, 0
      %s95 = sadd.s32 %s94, 1
      %s96 = scalar_select %p93, %s94, %s95
      %p99 = pneg %p93
      %p100 = scmp.eq.s32.totalorder %s16, 1
      %p101 = por %p99, %p100
      %p102 = scmp.ne.s32.totalorder %s94, %s97
      %p103 = scmp.eq.s32.totalorder %s16, 0
      %p104 = por %p102, %p103
      %p105 = scmp.ne.s32.totalorder %s94, %s97
      %p106 = scmp.eq.s32.totalorder %s21, 1
      %p107 = por %p105, %p106
      %p108 = scmp.ne.s32.totalorder %s97, %s98
      %p109 = scmp.eq.s32.totalorder %s21, 0
      %p110 = por %p108, %p109
      %p111 = scmp.ne.s32.totalorder %s97, %s98
      %p112 = scmp.eq.s32.totalorder %s22, 1
      %p113 = por %p111, %p112
      %p115 = scmp.ne.s32.totalorder %s98, %s114
      %p116 = scmp.eq.s32.totalorder %s22, 0
      %p117 = por %p115, %p116
      %p118 = scmp.le.s32.totalorder 1, %s16
      %p119 = scmp.lt.s32.totalorder %s16, 3
      %p120 = pnand %p118, %p119
      %p121 = pneg %p120
      // Predicated region
      $region9: #{tpu_custom_call.1} parent=5 // pred_check
        _
      $region10: #{tpu_custom_call.1} parent=5 // pred_check_branch
        %123 = sbr.rel (%p120) target = $region12
      $region11: #{tpu_custom_call.1} parent=5 // pred_region
        %s124 = ssub.s32 %s16, 1
        // Predicated region
        $region13: #{tpu_custom_call.1} parent=11 // pred_check
          %p125 = pneg %p63
        $region14: #{tpu_custom_call.1} parent=11 // pred_check_branch
          %127 = sbr.rel (%p125) target = $region16
        $region15: #{tpu_custom_call.1} parent=11 // pred_region
          %s129 = ssub.s32 25600, 25600
          %130 = vsyncadd [#allocation6], %s129
          %s131 = sshll.u32 [#allocation5], 4
          %s132 = int_to_ptr.vmem [resolvable:$true] %s131
          %137 = dma.hbm_to_vmem [thread:$0]  %s1, 25600, %s132, [#allocation6], 512, 512, 32
        $region16: #{tpu_custom_call.1} parent=11 // pred_fallthru
          _
        // Predicated region
        $region17: #{tpu_custom_call.1} parent=11 // pred_check
          %p138 = pneg %p84
        $region18: #{tpu_custom_call.1} parent=11 // pred_check_branch
          %140 = sbr.rel (%p138) target = $region20
        $region19: #{tpu_custom_call.1} parent=11 // pred_region
          _
        $region20: #{tpu_custom_call.1} parent=11 // pred_fallthru
          _
      $region12: #{tpu_custom_call.1} parent=5 // pred_fallthru
        _
      %p141 = scmp.lt.s32.totalorder %s16, 2
      // Predicated region
      $region21: #{tpu_custom_call.1} parent=5 // pred_check
        %p142 = pneg %p141
      $region22: #{tpu_custom_call.1} parent=5 // pred_check_branch
        %144 = sbr.rel (%p142) target = $region24
      $region23: #{tpu_custom_call.1} parent=5 // pred_region
        // Predicated region
        $region25: #{tpu_custom_call.1} parent=23 // pred_check
          %p145 = pneg %p36
        $region26: #{tpu_custom_call.1} parent=23 // pred_check_branch
          %147 = sbr.rel (%p145) target = $region28
        $region27: #{tpu_custom_call.1} parent=23 // pred_region
          %s148 = sand.u32 %s26, 1
          %s149 = scalar_lea.sflag [#allocation3], %s148
          %s150 = sand.u32 %s26, 1
          %s151 = smul.addr %s150, 32
          %s152 = scalar_lea.vmem [#allocation2], %s151
          %s154 = ssub.s32 512, 512
          %155 = vsyncadd %s149, %s154
          %s156 = smul.addr %s16, 4
          %s157 = smul.addr %s156, 128
          %s158 = scalar_lea.hbm %s0, %s157
          %s160 = sshll.u32 %s152, 4
          %s161 = int_to_ptr.vmem [resolvable:$true] %s160
          %163 = dma.hbm_to_vmem [thread:$0]  %s158, 512, %s161, %s149
        $region28: #{tpu_custom_call.1} parent=23 // pred_fallthru
          _
      $region24: #{tpu_custom_call.1} parent=5 // pred_fallthru
        _
      %p164 = scmp.le.s32.totalorder 1, %s16
      %p165 = scmp.lt.s32.totalorder %s16, 3
      %p166 = pnand %p164, %p165
      %p167 = pneg %p166
      // Predicated region
      $region29: #{tpu_custom_call.1} parent=5 // pred_check
        _
      $region30: #{tpu_custom_call.1} parent=5 // pred_check_branch
        %169 = sbr.rel (%p166) target = $region32
      $region31: #{tpu_custom_call.1} parent=5 // pred_region
        %s170 = ssub.s32 %s16, 1
        %s171 = sand.u32 %s29, 1
        %s172 = scalar_lea.sflag [#allocation3], %s171
        %s173 = sand.u32 %s29, 1
        %s174 = smul.addr %s173, 32
        %s175 = scalar_lea.vmem [#allocation2], %s174
        // Predicated region
        $region33: #{tpu_custom_call.1} parent=31 // pred_check
          %p176 = pneg %p42
        $region34: #{tpu_custom_call.1} parent=31 // pred_check_branch
          %178 = sbr.rel (%p176) target = $region36
        $region35: #{tpu_custom_call.1} parent=31 // pred_region
          %179 = dma.done %s172, 512
        $region36: #{tpu_custom_call.1} parent=31 // pred_fallthru
          _
        // Predicated region
        $region37: #{tpu_custom_call.1} parent=31 // pred_check
          %p180 = pneg %p63
        $region38: #{tpu_custom_call.1} parent=31 // pred_check_branch
          %182 = sbr.rel (%p180) target = $region40
        $region39: #{tpu_custom_call.1} parent=31 // pred_region
          %183 = dma.done [#allocation6], 25600
        $region40: #{tpu_custom_call.1} parent=31 // pred_fallthru
          _
        %s184 = sand.u32 %s29, 1
        %s185 = scalar_lea.sflag [#allocation3], %s184
        %s186 = sand.u32 %s29, 1
        %s187 = smul.addr %s186, 32
        %s188 = scalar_lea.vmem [#allocation2], %s187
        %p189 = pneg %p42
        %p190 = pneg %p39
        %p191 = pneg %p63
        %p192 = pneg %p60
        %p193 = pneg %p84
        %p194 = pneg %p81
        %p195 = pneg %p110
        %p196 = pneg %p107
        %s197 = sand.u32 %s97, 1
        %s198 = scalar_lea.sflag [#allocation4], %s197
        %s199 = sand.u32 %s97, 1
        %s200 = smul.addr %s199, 32
        %s201 = scalar_lea.vmem [#allocation7], %s200
        %v202 = vld [vmem:[%s175] sm:$0xff]
        %v203 = vld [vmem:[%s175 + $0x8] sm:$0xff]
        %v204 = vld [vmem:[%s175 + $0x10] sm:$0xff]
        %v205 = vld [vmem:[%s175 + $0x18] sm:$0xff]
        %v206 = vld [vmem:[#allocation5] sm:$0xff]
        %v207 = vld [vmem:[#allocation5 + $0x8] sm:$0xff]
        %v208 = vld [vmem:[#allocation5 + $0x10] sm:$0xff]
        %v209 = vld [vmem:[#allocation5 + $0x18] sm:$0xff]
        %v210 = vld [vmem:[#allocation5 + $0x20] sm:$0xff]
        %v211 = vld [vmem:[#allocation5 + $0x28] sm:$0xff]
        %v212 = vld [vmem:[#allocation5 + $0x30] sm:$0xff]
        %v213 = vld [vmem:[#allocation5 + $0x38] sm:$0xff]
        %v214 = vld [vmem:[#allocation5 + $0x40] sm:$0xff]
        %v215 = vld [vmem:[#allocation5 + $0x48] sm:$0xff]
        %v216 = vld [vmem:[#allocation5 + $0x50] sm:$0xff]
        %v217 = vld [vmem:[#allocation5 + $0x58] sm:$0xff]
        %v218 = vld [vmem:[#allocation5 + $0x60] sm:$0xff]
        %v219 = vld [vmem:[#allocation5 + $0x68] sm:$0xff]
        %v220 = vld [vmem:[#allocation5 + $0x70] sm:$0xff]
        %v221 = vld [vmem:[#allocation5 + $0x78] sm:$0xff]
        %v222 = vld [vmem:[#allocation5 + $0x80] sm:$0xff]
        %v223 = vld [vmem:[#allocation5 + $0x88] sm:$0xff]
        %v224 = vld [vmem:[#allocation5 + $0x90] sm:$0xff]
        %v225 = vld [vmem:[#allocation5 + $0x98] sm:$0xff]
        %v226 = vld [vmem:[#allocation5 + $0xa0] sm:$0xff]
        %v227 = vld [vmem:[#allocation5 + $0xa8] sm:$0xff]
        %v228 = vld [vmem:[#allocation5 + $0xb0] sm:$0xff]
        %v229 = vld [vmem:[#allocation5 + $0xb8] sm:$0xff]
        %v230 = vld [vmem:[#allocation5 + $0xc0] sm:$0xff]
        %v231 = vld [vmem:[#allocation5 + $0xc8] sm:$0xff]
        %v232 = vld [vmem:[#allocation5 + $0xd0] sm:$0xff]
        %v233 = vld [vmem:[#allocation5 + $0xd8] sm:$0xff]
        %v234 = vld [vmem:[#allocation5 + $0xe0] sm:$0xff]
        %v235 = vld [vmem:[#allocation5 + $0xe8] sm:$0xff]
        %v236 = vld [vmem:[#allocation5 + $0xf0] sm:$0xff]
        %v237 = vld [vmem:[#allocation5 + $0xf8] sm:$0xff]
        %v238 = vld [vmem:[#allocation5 + $0x100] sm:$0xff]
        %v239 = vld [vmem:[#allocation5 + $0x108] sm:$0xff]
        %v240 = vld [vmem:[#allocation5 + $0x110] sm:$0xff]
        %v241 = vld [vmem:[#allocation5 + $0x118] sm:$0xff]
        %v242 = vld [vmem:[#allocation5 + $0x120] sm:$0xff]
        %v243 = vld [vmem:[#allocation5 + $0x128] sm:$0xff]
        %v244 = vld [vmem:[#allocation5 + $0x130] sm:$0xff]
        %v245 = vld [vmem:[#allocation5 + $0x138] sm:$0xff]
        %v246 = vld [vmem:[#allocation5 + $0x140] sm:$0xff]
        %v247 = vld [vmem:[#allocation5 + $0x148] sm:$0xff]
        %v248 = vld [vmem:[#allocation5 + $0x150] sm:$0xff]
        %v249 = vld [vmem:[#allocation5 + $0x158] sm:$0xff]
        %v250 = vld [vmem:[#allocation5 + $0x160] sm:$0xff]
        %v251 = vld [vmem:[#allocation5 + $0x168] sm:$0xff]
        %v252 = vld [vmem:[#allocation5 + $0x170] sm:$0xff]
        %v253 = vld [vmem:[#allocation5 + $0x178] sm:$0xff]
        %v254 = vld [vmem:[#allocation5 + $0x180] sm:$0xff]
        %v255 = vld [vmem:[#allocation5 + $0x188] sm:$0xff]
        %v256 = vld [vmem:[#allocation5 + $0x190] sm:$0xff]
        %v257 = vld [vmem:[#allocation5 + $0x198] sm:$0xff]
        %v258 = vld [vmem:[#allocation5 + $0x1a0] sm:$0xff]
        %v259 = vld [vmem:[#allocation5 + $0x1a8] sm:$0xff]
        %v260 = vld [vmem:[#allocation5 + $0x1b0] sm:$0xff]
        %v261 = vld [vmem:[#allocation5 + $0x1b8] sm:$0xff]
        %v262 = vld [vmem:[#allocation5 + $0x1c0] sm:$0xff]
        %v263 = vld [vmem:[#allocation5 + $0x1c8] sm:$0xff]
        %v264 = vld [vmem:[#allocation5 + $0x1d0] sm:$0xff]
        %v265 = vld [vmem:[#allocation5 + $0x1d8] sm:$0xff]
        %v266 = vld [vmem:[#allocation5 + $0x1e0] sm:$0xff]
        %v267 = vld [vmem:[#allocation5 + $0x1e8] sm:$0xff]
        %v268 = vld [vmem:[#allocation5 + $0x1f0] sm:$0xff]
        %v269 = vld [vmem:[#allocation5 + $0x1f8] sm:$0xff]
        %v270 = vld [vmem:[#allocation5 + $0x200] sm:$0xff]
        %v271 = vld [vmem:[#allocation5 + $0x208] sm:$0xff]
        %v272 = vld [vmem:[#allocation5 + $0x210] sm:$0xff]
        %v273 = vld [vmem:[#allocation5 + $0x218] sm:$0xff]
        %v274 = vld [vmem:[#allocation5 + $0x220] sm:$0xff]
        %v275 = vld [vmem:[#allocation5 + $0x228] sm:$0xff]
        %v276 = vld [vmem:[#allocation5 + $0x230] sm:$0xff]
        %v277 = vld [vmem:[#allocation5 + $0x238] sm:$0xff]
        %v278 = vld [vmem:[#allocation5 + $0x240] sm:$0xff]
        %v279 = vld [vmem:[#allocation5 + $0x248] sm:$0xff]
        %v280 = vld [vmem:[#allocation5 + $0x250] sm:$0xff]
        %v281 = vld [vmem:[#allocation5 + $0x258] sm:$0xff]
        %v282 = vld [vmem:[#allocation5 + $0x260] sm:$0xff]
        %v283 = vld [vmem:[#allocation5 + $0x268] sm:$0xff]
        %v284 = vld [vmem:[#allocation5 + $0x270] sm:$0xff]
        %v285 = vld [vmem:[#allocation5 + $0x278] sm:$0xff]
        %v286 = vld [vmem:[#allocation5 + $0x280] sm:$0xff]
        %v287 = vld [vmem:[#allocation5 + $0x288] sm:$0xff]
        %v288 = vld [vmem:[#allocation5 + $0x290] sm:$0xff]
        %v289 = vld [vmem:[#allocation5 + $0x298] sm:$0xff]
        %v290 = vld [vmem:[#allocation5 + $0x2a0] sm:$0xff]
        %v291 = vld [vmem:[#allocation5 + $0x2a8] sm:$0xff]
        %v292 = vld [vmem:[#allocation5 + $0x2b0] sm:$0xff]
        %v293 = vld [vmem:[#allocation5 + $0x2b8] sm:$0xff]
        %v294 = vld [vmem:[#allocation5 + $0x2c0] sm:$0xff]
        %v295 = vld [vmem:[#allocation5 + $0x2c8] sm:$0xff]
        %v296 = vld [vmem:[#allocation5 + $0x2d0] sm:$0xff]
        %v297 = vld [vmem:[#allocation5 + $0x2d8] sm:$0xff]
        %v298 = vld [vmem:[#allocation5 + $0x2e0] sm:$0xff]
        %v299 = vld [vmem:[#allocation5 + $0x2e8] sm:$0xff]
        %v300 = vld [vmem:[#allocation5 + $0x2f0] sm:$0xff]
        %v301 = vld [vmem:[#allocation5 + $0x2f8] sm:$0xff]
        %v302 = vld [vmem:[#allocation5 + $0x300] sm:$0xff]
        %v303 = vld [vmem:[#allocation5 + $0x308] sm:$0xff]
        %v304 = vld [vmem:[#allocation5 + $0x310] sm:$0xff]
        %v305 = vld [vmem:[#allocation5 + $0x318] sm:$0xff]
        %v306 = vld [vmem:[#allocation5 + $0x320] sm:$0xff]
        %v307 = vld [vmem:[#allocation5 + $0x328] sm:$0xff]
        %v308 = vld [vmem:[#allocation5 + $0x330] sm:$0xff]
        %v309 = vld [vmem:[#allocation5 + $0x338] sm:$0xff]
        %v310 = vld [vmem:[#allocation5 + $0x340] sm:$0xff]
        %v311 = vld [vmem:[#allocation5 + $0x348] sm:$0xff]
        %v312 = vld [vmem:[#allocation5 + $0x350] sm:$0xff]
        %v313 = vld [vmem:[#allocation5 + $0x358] sm:$0xff]
        %v314 = vld [vmem:[#allocation5 + $0x360] sm:$0xff]
        %v315 = vld [vmem:[#allocation5 + $0x368] sm:$0xff]
        %v316 = vld [vmem:[#allocation5 + $0x370] sm:$0xff]
        %v317 = vld [vmem:[#allocation5 + $0x378] sm:$0xff]
        %v318 = vld [vmem:[#allocation5 + $0x380] sm:$0xff]
        %v319 = vld [vmem:[#allocation5 + $0x388] sm:$0xff]
        %v320 = vld [vmem:[#allocation5 + $0x390] sm:$0xff]
        %v321 = vld [vmem:[#allocation5 + $0x398] sm:$0xff]
        %v322 = vld [vmem:[#allocation5 + $0x3a0] sm:$0xff]
        %v323 = vld [vmem:[#allocation5 + $0x3a8] sm:$0xff]
        %v324 = vld [vmem:[#allocation5 + $0x3b0] sm:$0xff]
        %v325 = vld [vmem:[#allocation5 + $0x3b8] sm:$0xff]
        %v326 = vld [vmem:[#allocation5 + $0x3c0] sm:$0xff]
        %v327 = vld [vmem:[#allocation5 + $0x3c8] sm:$0xff]
        %v328 = vld [vmem:[#allocation5 + $0x3d0] sm:$0xff]
        %v329 = vld [vmem:[#allocation5 + $0x3d8] sm:$0xff]
        %v330 = vld [vmem:[#allocation5 + $0x3e0] sm:$0xff]
        %v331 = vld [vmem:[#allocation5 + $0x3e8] sm:$0xff]
        %v332 = vld [vmem:[#allocation5 + $0x3f0] sm:$0xff]
        %v333 = vld [vmem:[#allocation5 + $0x3f8] sm:$0xff]
        %v334 = vld [vmem:[#allocation5 + $0x400] sm:$0xff]
        %v335 = vld [vmem:[#allocation5 + $0x408] sm:$0xff]
        %v336 = vld [vmem:[#allocation5 + $0x410] sm:$0xff]
        %v337 = vld [vmem:[#allocation5 + $0x418] sm:$0xff]
        %v338 = vld [vmem:[#allocation5 + $0x420] sm:$0xff]
        %v339 = vld [vmem:[#allocation5 + $0x428] sm:$0xff]
        %v340 = vld [vmem:[#allocation5 + $0x430] sm:$0xff]
        %v341 = vld [vmem:[#allocation5 + $0x438] sm:$0xff]
        %v342 = vld [vmem:[#allocation5 + $0x440] sm:$0xff]
        %v343 = vld [vmem:[#allocation5 + $0x448] sm:$0xff]
        %v344 = vld [vmem:[#allocation5 + $0x450] sm:$0xff]
        %v345 = vld [vmem:[#allocation5 + $0x458] sm:$0xff]
        %v346 = vld [vmem:[#allocation5 + $0x460] sm:$0xff]
        %v347 = vld [vmem:[#allocation5 + $0x468] sm:$0xff]
        %v348 = vld [vmem:[#allocation5 + $0x470] sm:$0xff]
        %v349 = vld [vmem:[#allocation5 + $0x478] sm:$0xff]
        %v350 = vld [vmem:[#allocation5 + $0x480] sm:$0xff]
        %v351 = vld [vmem:[#allocation5 + $0x488] sm:$0xff]
        %v352 = vld [vmem:[#allocation5 + $0x490] sm:$0xff]
        %v353 = vld [vmem:[#allocation5 + $0x498] sm:$0xff]
        %v354 = vld [vmem:[#allocation5 + $0x4a0] sm:$0xff]
        %v355 = vld [vmem:[#allocation5 + $0x4a8] sm:$0xff]
        %v356 = vld [vmem:[#allocation5 + $0x4b0] sm:$0xff]
        %v357 = vld [vmem:[#allocation5 + $0x4b8] sm:$0xff]
        %v358 = vld [vmem:[#allocation5 + $0x4c0] sm:$0xff]
        %v359 = vld [vmem:[#allocation5 + $0x4c8] sm:$0xff]
        %v360 = vld [vmem:[#allocation5 + $0x4d0] sm:$0xff]
        %v361 = vld [vmem:[#allocation5 + $0x4d8] sm:$0xff]
        %v362 = vld [vmem:[#allocation5 + $0x4e0] sm:$0xff]
        %v363 = vld [vmem:[#allocation5 + $0x4e8] sm:$0xff]
        %v364 = vld [vmem:[#allocation5 + $0x4f0] sm:$0xff]
        %v365 = vld [vmem:[#allocation5 + $0x4f8] sm:$0xff]
        %v366 = vld [vmem:[#allocation5 + $0x500] sm:$0xff]
        %v367 = vld [vmem:[#allocation5 + $0x508] sm:$0xff]
        %v368 = vld [vmem:[#allocation5 + $0x510] sm:$0xff]
        %v369 = vld [vmem:[#allocation5 + $0x518] sm:$0xff]
        %v370 = vld [vmem:[#allocation5 + $0x520] sm:$0xff]
        %v371 = vld [vmem:[#allocation5 + $0x528] sm:$0xff]
        %v372 = vld [vmem:[#allocation5 + $0x530] sm:$0xff]
        %v373 = vld [vmem:[#allocation5 + $0x538] sm:$0xff]
        %v374 = vld [vmem:[#allocation5 + $0x540] sm:$0xff]
        %v375 = vld [vmem:[#allocation5 + $0x548] sm:$0xff]
        %v376 = vld [vmem:[#allocation5 + $0x550] sm:$0xff]
        %v377 = vld [vmem:[#allocation5 + $0x558] sm:$0xff]
        %v378 = vld [vmem:[#allocation5 + $0x560] sm:$0xff]
        %v379 = vld [vmem:[#allocation5 + $0x568] sm:$0xff]
        %v380 = vld [vmem:[#allocation5 + $0x570] sm:$0xff]
        %v381 = vld [vmem:[#allocation5 + $0x578] sm:$0xff]
        %v382 = vld [vmem:[#allocation5 + $0x580] sm:$0xff]
        %v383 = vld [vmem:[#allocation5 + $0x588] sm:$0xff]
        %v384 = vld [vmem:[#allocation5 + $0x590] sm:$0xff]
        %v385 = vld [vmem:[#allocation5 + $0x598] sm:$0xff]
        %v386 = vld [vmem:[#allocation5 + $0x5a0] sm:$0xff]
        %v387 = vld [vmem:[#allocation5 + $0x5a8] sm:$0xff]
        %v388 = vld [vmem:[#allocation5 + $0x5b0] sm:$0xff]
        %v389 = vld [vmem:[#allocation5 + $0x5b8] sm:$0xff]
        %v390 = vld [vmem:[#allocation5 + $0x5c0] sm:$0xff]
        %v391 = vld [vmem:[#allocation5 + $0x5c8] sm:$0xff]
        %v392 = vld [vmem:[#allocation5 + $0x5d0] sm:$0xff]
        %v393 = vld [vmem:[#allocation5 + $0x5d8] sm:$0xff]
        %v394 = vld [vmem:[#allocation5 + $0x5e0] sm:$0xff]
        %v395 = vld [vmem:[#allocation5 + $0x5e8] sm:$0xff]
        %v396 = vld [vmem:[#allocation5 + $0x5f0] sm:$0xff]
        %v397 = vld [vmem:[#allocation5 + $0x5f8] sm:$0xff]
        %v398 = vld [vmem:[#allocation5 + $0x600] sm:$0xff]
        %v399 = vld [vmem:[#allocation5 + $0x608] sm:$0xff]
        %v400 = vld [vmem:[#allocation5 + $0x610] sm:$0xff]
        %v401 = vld [vmem:[#allocation5 + $0x618] sm:$0xff]
        %v402 = vld [vmem:[#allocation5 + $0x620] sm:$0xff]
        %v403 = vld [vmem:[#allocation5 + $0x628] sm:$0xff]
        %v404 = vld [vmem:[#allocation5 + $0x630] sm:$0xff]
        %v405 = vld [vmem:[#allocation5 + $0x638] sm:$0xff]
        %v406 = vld [vmem:[%s2] sm:$0xf]
        %v408 = vlaneseq
        %v409 = vshrl.u32 %v408, 7
        %v410 = vsub.s32 0, %v409
        %v411 = vrot.slane %v406, %v410
        %v412 = vlaneseq
        %v413 = vshrl.u32 %v412, 7
        %v414 = vsub.s32 1, %v413
        %v415 = vrot.slane %v406, %v414
        %v416 = vlaneseq
        %v417 = vshrl.u32 %v416, 7
        %v418 = vsub.s32 2, %v417
        %v419 = vrot.slane %v406, %v418
        %v420 = vlaneseq
        %v421 = vshrl.u32 %v420, 7
        %v422 = vsub.s32 3, %v421
        %v423 = vrot.slane %v406, %v422
        %vm428 = vcmask 130048
        %v430 = vsel %vm428, %v205, 0
        %432 = vmatprep.subr.mxu0 %v207
        %433 = vmatpush1.msra.mxu0 %v206
        %434 = vmatprep.subr.mxu0 %v211
        %435 = vmatpush1.msra.mxu0 %v210
        %436 = vmatprep.subr.mxu0 %v215
        %437 = vmatpush1.msra.mxu0 %v214
        %438 = vmatprep.subr.mxu0 %v219
        %439 = vmatpush1.msra.mxu0 %v218
        %440 = vmatprep.subr.mxu0 %v223
        %441 = vmatpush1.msra.mxu0 %v222
        %442 = vmatprep.subr.mxu0 %v227
        %443 = vmatpush1.msra.mxu0 %v226
        %444 = vmatprep.subr.mxu0 %v231
        %445 = vmatpush1.msra.mxu0 %v230
        %446 = vmatprep.subr.mxu0 %v235
        %447 = vmatpush1.msra.mxu0 %v234
        %448 = vmatprep.subr.mxu0 %v239
        %449 = vmatpush1.msra.mxu0 %v238
        %450 = vmatprep.subr.mxu0 %v243
        %451 = vmatpush1.msra.mxu0 %v242
        %452 = vmatprep.subr.mxu0 %v247
        %453 = vmatpush1.msra.mxu0 %v246
        %454 = vmatprep.subr.mxu0 %v251
        %455 = vmatpush1.msra.mxu0 %v250
        %456 = vmatprep.subr.mxu0 %v255
        %457 = vmatpush1.msra.mxu0 %v254
        %458 = vmatprep.subr.mxu0 %v259
        %459 = vmatpush1.msra.mxu0 %v258
        %460 = vmatprep.subr.mxu0 %v263
        %461 = vmatpush1.msra.mxu0 %v262
        %462 = vmatprep.subr.mxu0 %v267
        %463 = vmatpush1.msra.mxu0 %v266
        %464 = vmatprep.subr.mxu0 %v271
        %465 = vmatpush1.msra.mxu0 %v270
        %466 = vmatprep.subr.mxu0 %v275
        %467 = vmatpush1.msra.mxu0 %v274
        %468 = vmatprep.subr.mxu0 %v279
        %469 = vmatpush1.msra.mxu0 %v278
        %470 = vmatprep.subr.mxu0 %v283
        %471 = vmatpush1.msra.mxu0 %v282
        %472 = vmatprep.subr.mxu0 %v287
        %473 = vmatpush1.msra.mxu0 %v286
        %474 = vmatprep.subr.mxu0 %v291
        %475 = vmatpush1.msra.mxu0 %v290
        %476 = vmatprep.subr.mxu0 %v295
        %477 = vmatpush1.msra.mxu0 %v294
        %478 = vmatprep.subr.mxu0 %v299
        %479 = vmatpush1.msra.mxu0 %v298
        %480 = vmatprep.subr.mxu0 %v303
        %481 = vmatpush1.msra.mxu0 %v302
        %482 = vmatprep.subr.mxu0 %v307
        %483 = vmatpush1.msra.mxu0 %v306
        %484 = vmatprep.subr.mxu0 %v311
        %485 = vmatpush1.msra.mxu0 %v310
        %486 = vmatprep.subr.mxu0 %v315
        %487 = vmatpush1.msra.mxu0 %v314
        %488 = vmatprep.subr.mxu0 %v319
        %489 = vmatpush1.msra.mxu0 %v318
        %490 = vmatprep.subr.mxu0 %v323
        %491 = vmatpush1.msra.mxu0 %v322
        %492 = vmatprep.subr.mxu0 %v327
        %493 = vmatpush1.msra.mxu0 %v326
        %494 = vmatprep.subr.mxu0 %v331
        %495 = vmatpush1.msra.mxu0 %v330
        %496 = vmatprep.mubr.f32.mxu0 %v203
        %497 = vmatmul.mubr.f32.gmra.mrb[0].mxu0 %v202
        %v498 = vpop.f32.mrb[0].mxu0
        %v499 = vadd.f32 %v411, %v498
        %v500 = vpop.f32.mrb[0].mxu0
        %v501 = vadd.f32 %v415, %v500
        %502 = vdwg.mxu0
        %503 = vmatprep.subr.mxu0 %v335
        %504 = vmatpush1.msra.mxu0 %v334
        %505 = vmatprep.subr.mxu0 %v339
        %506 = vmatpush1.msra.mxu0 %v338
        %507 = vmatprep.subr.mxu0 %v343
        %508 = vmatpush1.msra.mxu0 %v342
        %509 = vmatprep.subr.mxu0 %v347
        %510 = vmatpush1.msra.mxu0 %v346
        %511 = vmatprep.subr.mxu0 %v351
        %512 = vmatpush1.msra.mxu0 %v350
        %513 = vmatprep.subr.mxu0 %v355
        %514 = vmatpush1.msra.mxu0 %v354
        %515 = vmatprep.subr.mxu0 %v359
        %516 = vmatpush1.msra.mxu0 %v358
        %517 = vmatprep.subr.mxu0 %v363
        %518 = vmatpush1.msra.mxu0 %v362
        %519 = vmatprep.subr.mxu0 %v367
        %520 = vmatpush1.msra.mxu0 %v366
        %521 = vmatprep.subr.mxu0 %v371
        %522 = vmatpush1.msra.mxu0 %v370
        %523 = vmatprep.subr.mxu0 %v375
        %524 = vmatpush1.msra.mxu0 %v374
        %525 = vmatprep.subr.mxu0 %v379
        %526 = vmatpush1.msra.mxu0 %v378
        %527 = vmatprep.subr.mxu0 %v383
        %528 = vmatpush1.msra.mxu0 %v382
        %529 = vmatprep.subr.mxu0 %v387
        %530 = vmatpush1.msra.mxu0 %v386
        %531 = vmatprep.subr.mxu0 %v391
        %532 = vmatpush1.msra.mxu0 %v390
        %533 = vmatprep.subr.mxu0 %v395
        %534 = vmatpush1.msra.mxu0 %v394
        %535 = vmatprep.subr.mxu0 %v399
        %536 = vmatpush1.msra.mxu0 %v398
        %537 = vmatprep.subr.mxu0 %v403
        %538 = vmatpush1.msra.mxu0 %v402
        %539 = vmatprep.subr.mxu0 0.0
        %540 = vmatpush1.msra.mxu0 0.0
        %541 = vmatprep.subr.mxu0 0.0
        %542 = vmatpush1.msra.mxu0 0.0
        %543 = vmatprep.subr.mxu0 0.0
        %544 = vmatpush1.msra.mxu0 0.0
        %545 = vmatprep.subr.mxu0 0.0
        %546 = vmatpush1.msra.mxu0 0.0
        %547 = vmatprep.subr.mxu0 0.0
        %548 = vmatpush1.msra.mxu0 0.0
        %549 = vmatprep.subr.mxu0 0.0
        %550 = vmatpush1.msra.mxu0 0.0
        %551 = vmatprep.subr.mxu0 0.0
        %552 = vmatpush1.msra.mxu0 0.0
        %553 = vmatprep.subr.mxu0 0.0
        %554 = vmatpush1.msra.mxu0 0.0
        %555 = vmatprep.subr.mxu0 0.0
        %556 = vmatpush1.msra.mxu0 0.0
        %557 = vmatprep.subr.mxu0 0.0
        %558 = vmatpush1.msra.mxu0 0.0
        %559 = vmatprep.subr.mxu0 0.0
        %560 = vmatpush1.msra.mxu0 0.0
        %561 = vmatprep.subr.mxu0 0.0
        %562 = vmatpush1.msra.mxu0 0.0
        %563 = vmatprep.subr.mxu0 0.0
        %564 = vmatpush1.msra.mxu0 0.0
        %565 = vmatprep.subr.mxu0 0.0
        %566 = vmatpush1.msra.mxu0 0.0
        %567 = vmatprep.mubr.f32.mxu0 %v430
        %568 = vmatmul.mubr.f32.gmra.mrb[0].mxu0 %v204
        %v569 = vpop.f32.mrb[0].mxu0
        %v570 = vadd.f32 %v499, %v569
        %v571 = vpop.f32.mrb[0].mxu0
        %v572 = vadd.f32 %v501, %v571
        %573 = vdwg.mxu0
        %574 = vmatprep.subr.mxu0 %v209
        %575 = vmatpush1.msra.mxu0 %v208
        %576 = vmatprep.subr.mxu0 %v213
        %577 = vmatpush1.msra.mxu0 %v212
        %578 = vmatprep.subr.mxu0 %v217
        %579 = vmatpush1.msra.mxu0 %v216
        %580 = vmatprep.subr.mxu0 %v221
        %581 = vmatpush1.msra.mxu0 %v220
        %582 = vmatprep.subr.mxu0 %v225
        %583 = vmatpush1.msra.mxu0 %v224
        %584 = vmatprep.subr.mxu0 %v229
        %585 = vmatpush1.msra.mxu0 %v228
        %586 = vmatprep.subr.mxu0 %v233
        %587 = vmatpush1.msra.mxu0 %v232
        %588 = vmatprep.subr.mxu0 %v237
        %589 = vmatpush1.msra.mxu0 %v236
        %590 = vmatprep.subr.mxu0 %v241
        %591 = vmatpush1.msra.mxu0 %v240
        %592 = vmatprep.subr.mxu0 %v245
        %593 = vmatpush1.msra.mxu0 %v244
        %594 = vmatprep.subr.mxu0 %v249
        %595 = vmatpush1.msra.mxu0 %v248
        %596 = vmatprep.subr.mxu0 %v253
        %597 = vmatpush1.msra.mxu0 %v252
        %598 = vmatprep.subr.mxu0 %v257
        %599 = vmatpush1.msra.mxu0 %v256
        %600 = vmatprep.subr.mxu0 %v261
        %601 = vmatpush1.msra.mxu0 %v260
        %602 = vmatprep.subr.mxu0 %v265
        %603 = vmatpush1.msra.mxu0 %v264
        %604 = vmatprep.subr.mxu0 %v269
        %605 = vmatpush1.msra.mxu0 %v268
        %606 = vmatprep.subr.mxu0 %v273
        %607 = vmatpush1.msra.mxu0 %v272
        %608 = vmatprep.subr.mxu0 %v277
        %609 = vmatpush1.msra.mxu0 %v276
        %610 = vmatprep.subr.mxu0 %v281
        %611 = vmatpush1.msra.mxu0 %v280
        %612 = vmatprep.subr.mxu0 %v285
        %613 = vmatpush1.msra.mxu0 %v284
        %614 = vmatprep.subr.mxu0 %v289
        %615 = vmatpush1.msra.mxu0 %v288
        %616 = vmatprep.subr.mxu0 %v293
        %617 = vmatpush1.msra.mxu0 %v292
        %618 = vmatprep.subr.mxu0 %v297
        %619 = vmatpush1.msra.mxu0 %v296
        %620 = vmatprep.subr.mxu0 %v301
        %621 = vmatpush1.msra.mxu0 %v300
        %622 = vmatprep.subr.mxu0 %v305
        %623 = vmatpush1.msra.mxu0 %v304
        %624 = vmatprep.subr.mxu0 %v309
        %625 = vmatpush1.msra.mxu0 %v308
        %626 = vmatprep.subr.mxu0 %v313
        %627 = vmatpush1.msra.mxu0 %v312
        %628 = vmatprep.subr.mxu0 %v317
        %629 = vmatpush1.msra.mxu0 %v316
        %630 = vmatprep.subr.mxu0 %v321
        %631 = vmatpush1.msra.mxu0 %v320
        %632 = vmatprep.subr.mxu0 %v325
        %633 = vmatpush1.msra.mxu0 %v324
        %634 = vmatprep.subr.mxu0 %v329
        %635 = vmatpush1.msra.mxu0 %v328
        %636 = vmatprep.subr.mxu0 %v333
        %637 = vmatpush1.msra.mxu0 %v332
        %638 = vmatprep.mubr.f32.mxu0 %v203
        %639 = vmatmul.mubr.f32.gmra.mrb[0].mxu0 %v202
        %v640 = vpop.f32.mrb[0].mxu0
        %v641 = vadd.f32 %v419, %v640
        %v642 = vpop.f32.mrb[0].mxu0
        %v643 = vadd.f32 %v423, %v642
        %644 = vdwg.mxu0
        %645 = vmatprep.subr.mxu0 %v337
        %646 = vmatpush1.msra.mxu0 %v336
        %647 = vmatprep.subr.mxu0 %v341
        %648 = vmatpush1.msra.mxu0 %v340
        %649 = vmatprep.subr.mxu0 %v345
        %650 = vmatpush1.msra.mxu0 %v344
        %651 = vmatprep.subr.mxu0 %v349
        %652 = vmatpush1.msra.mxu0 %v348
        %653 = vmatprep.subr.mxu0 %v353
        %654 = vmatpush1.msra.mxu0 %v352
        %655 = vmatprep.subr.mxu0 %v357
        %656 = vmatpush1.msra.mxu0 %v356
        %657 = vmatprep.subr.mxu0 %v361
        %658 = vmatpush1.msra.mxu0 %v360
        %659 = vmatprep.subr.mxu0 %v365
        %660 = vmatpush1.msra.mxu0 %v364
        %661 = vmatprep.subr.mxu0 %v369
        %662 = vmatpush1.msra.mxu0 %v368
        %663 = vmatprep.subr.mxu0 %v373
        %664 = vmatpush1.msra.mxu0 %v372
        %665 = vmatprep.subr.mxu0 %v377
        %666 = vmatpush1.msra.mxu0 %v376
        %667 = vmatprep.subr.mxu0 %v381
        %668 = vmatpush1.msra.mxu0 %v380
        %669 = vmatprep.subr.mxu0 %v385
        %670 = vmatpush1.msra.mxu0 %v384
        %671 = vmatprep.subr.mxu0 %v389
        %672 = vmatpush1.msra.mxu0 %v388
        %673 = vmatprep.subr.mxu0 %v393
        %674 = vmatpush1.msra.mxu0 %v392
        %675 = vmatprep.subr.mxu0 %v397
        %676 = vmatpush1.msra.mxu0 %v396
        %677 = vmatprep.subr.mxu0 %v401
        %678 = vmatpush1.msra.mxu0 %v400
        %679 = vmatprep.subr.mxu0 %v405
        %680 = vmatpush1.msra.mxu0 %v404
        %681 = vmatprep.subr.mxu0 0.0
        %682 = vmatpush1.msra.mxu0 0.0
        %683 = vmatprep.subr.mxu0 0.0
        %684 = vmatpush1.msra.mxu0 0.0
        %685 = vmatprep.subr.mxu0 0.0
        %686 = vmatpush1.msra.mxu0 0.0
        %687 = vmatprep.subr.mxu0 0.0
        %688 = vmatpush1.msra.mxu0 0.0
        %689 = vmatprep.subr.mxu0 0.0
        %690 = vmatpush1.msra.mxu0 0.0
        %691 = vmatprep.subr.mxu0 0.0
        %692 = vmatpush1.msra.mxu0 0.0
        %693 = vmatprep.subr.mxu0 0.0
        %694 = vmatpush1.msra.mxu0 0.0
        %695 = vmatprep.subr.mxu0 0.0
        %696 = vmatpush1.msra.mxu0 0.0
        %697 = vmatprep.subr.mxu0 0.0
        %698 = vmatpush1.msra.mxu0 0.0
        %699 = vmatprep.subr.mxu0 0.0
        %700 = vmatpush1.msra.mxu0 0.0
        %701 = vmatprep.subr.mxu0 0.0
        %702 = vmatpush1.msra.mxu0 0.0
        %703 = vmatprep.subr.mxu0 0.0
        %704 = vmatpush1.msra.mxu0 0.0
        %705 = vmatprep.subr.mxu0 0.0
        %706 = vmatpush1.msra.mxu0 0.0
        %707 = vmatprep.subr.mxu0 0.0
        %708 = vmatpush1.msra.mxu0 0.0
        %709 = vmatprep.mubr.f32.mxu0 %v430
        %710 = vmatmul.mubr.f32.gmra.mrb[0].mxu0 %v204
        %v711 = vpop.f32.mrb[0].mxu0
        %v712 = vadd.f32 %v641, %v711
        %v713 = vpop.f32.mrb[0].mxu0
        %v714 = vadd.f32 %v643, %v713
        %715 = vdwg.mxu0
        %v716 = vmax.f32 %v570, 0.0
        %v717 = vmax.f32 %v572, 0.0
        %v718 = vmax.f32 %v712, 0.0
        %v719 = vmax.f32 %v714, 0.0
        %720 = vst [vmem:[%s201] sm:$0xff] %v716
        %721 = vst [vmem:[%s201 + $0x8] sm:$0xff] %v717
        %722 = vst [vmem:[%s201 + $0x10] sm:$0xff] %v718
        %723 = vst.msk [vmem:[%s201 + $0x18] sm:$0xff] %vm428, %v719
        %s724 = sand.u32 %s97, 1
        %s725 = scalar_lea.sflag [#allocation4], %s724
        %s726 = sand.u32 %s97, 1
        %s727 = smul.addr %s726, 32
        %s728 = scalar_lea.vmem [#allocation7], %s727
        // Predicated region
        $region41: #{tpu_custom_call.1} parent=31 // pred_check
          %p729 = pneg %p107
        $region42: #{tpu_custom_call.1} parent=31 // pred_check_branch
          %731 = sbr.rel (%p729) target = $region44
        $region43: #{tpu_custom_call.1} parent=31 // pred_region
          %s733 = ssub.s32 512, 512
          %734 = vsyncadd %s725, %s733
          %s735 = smul.addr %s21, 4
          %s736 = smul.addr %s735, 128
          %s737 = scalar_lea.hbm %s3, %s736
          %s739 = sshll.u32 %s728, 4
          %s740 = int_to_ptr.vmem [resolvable:$true] %s739
          %742 = dma.vmem_to_hbm [thread:$0]  %s740, 512, %s737, %s725
        $region44: #{tpu_custom_call.1} parent=31 // pred_fallthru
          _
      $region32: #{tpu_custom_call.1} parent=5 // pred_fallthru
        _
      %p743 = scmp.le.s32.totalorder 2, %s16
      // Predicated region
      $region45: #{tpu_custom_call.1} parent=5 // pred_check
        %p744 = pneg %p743
      $region46: #{tpu_custom_call.1} parent=5 // pred_check_branch
        %746 = sbr.rel (%p744) target = $region48
      $region47: #{tpu_custom_call.1} parent=5 // pred_region
        %s747 = ssub.s32 %s16, 2
        // Predicated region
        $region49: #{tpu_custom_call.1} parent=47 // pred_check
          %p748 = pneg %p113
        $region50: #{tpu_custom_call.1} parent=47 // pred_check_branch
          %750 = sbr.rel (%p748) target = $region52
        $region51: #{tpu_custom_call.1} parent=47 // pred_region
          %s751 = sand.u32 %s98, 1
          %s752 = scalar_lea.sflag [#allocation4], %s751
          %s753 = sand.u32 %s98, 1
          %s754 = smul.addr %s753, 32
          %s755 = scalar_lea.vmem [#allocation7], %s754
          %756 = dma.done %s752, 512
        $region52: #{tpu_custom_call.1} parent=47 // pred_fallthru
          _
      $region48: #{tpu_custom_call.1} parent=5 // pred_fallthru
        _
    $region6: #{tpu_custom_call.1} parent=1 // loop_footer
      %s20 = sadd.s32 1, %s16
    $region7: #{tpu_custom_call.1} parent=1 // loop_footer_branch
      %15 = sbr.rel target = $region3
    $region8: #{tpu_custom_call.1} parent=1 // loop_exit
      _
    %757 = vsyncpa [#allocation3], 1
    %s758 = scalar_lea.sflag [#allocation3], 1
    %759 = vsyncpa %s758, 1
    %760 = vsyncpa [#allocation6], 1
    %761 = vsyncpa [#allocation4], 1
    %s762 = scalar_lea.sflag [#allocation4], 1
    %763 = vsyncpa %s762, 1

</llo_original>
